<compile_context>
chip_gen: v7x
topology: tpu7x:2x2x1
jax: 0.10.0
libtpu: 0.0.40
codegen_flags: <defaults>
</compile_context>

<pallas_src>
import functools

import jax
import jax.numpy as jnp
from jax.experimental import pallas as pl
from jax.experimental.pallas import tpu as pltpu


def _round_up(n, m):
    return ((n + m - 1) // m) * m


# ----------------------------- fused kernel -------------------------------

def _fused_kernel(xsx_ref, x_ref, slab_ref, out_ref, *,
                  F1, F2, H1, HT, F0p, approx_recip):
    """One fused block-diagonal MLP: Swish branch on cols [0,H1), ELU branch on
    cols [H1,HT).  Slab rows: [0,F0p) layer-0, then 3x HT hidden, HT head
    (cols 0/1 used), then 8 bias rows."""
    B = xsx_ref.shape[0]
    r_h = F0p                      # first hidden block
    r_head = F0p + 3 * HT          # head block
    r_b = r_head + HT              # bias rows (5 used, padded to 8)

    # Hoisted column mask selecting Swish vs ELU per output column.
    col = jax.lax.broadcasted_iota(jnp.int32, (B, HT), 1)
    is_swish = col < H1

    def stable_sigmoid(z):
        # sigmoid via a single exp(-|z|) + one reciprocal (EUP: 2 ops, no expm1).
        en = jnp.exp(-jnp.abs(z))                       # exp(z) for z<=0
        r = pl.reciprocal(1.0 + en, approx=approx_recip)
        return jnp.where(z >= 0.0, r, en * r), en

    def act(z):
        sig, en = stable_sigmoid(z)
        swish = z * sig                                  # Swish(z) = z*sigmoid(z)
        elu = jnp.where(z > 0.0, z, en - 1.0)            # ELU(alpha=1): exp(z)-1
        return jnp.where(is_swish, swish, elu)

    # Layer 0: lane-concat xsx||x (+zero pad) inside the kernel, single matmul
    # against the block "diagonal" layer-0 slab rows.
    pieces = [xsx_ref[...], x_ref[...]]
    if F0p > F1 + F2:
        pieces.append(jnp.zeros((B, F0p - F1 - F2), jnp.float32))
    xin = jnp.concatenate(pieces, axis=1)                # (B, F0p)

    # NOTE: default matmul precision matches the pure-JAX reference; pass
    # precision=jax.lax.Precision.HIGHEST here if strict f32 parity is needed.
    h = act(jnp.dot(xin, slab_ref[0:F0p, :],
                    preferred_element_type=jnp.float32) + slab_ref[r_b:r_b + 1, :])

    # Hidden layers 1..3: block-diagonal (HT, HT) matmuls.
    for i in range(3):
        base = r_h + i * HT
        h = act(jnp.dot(h, slab_ref[base:base + HT, :],
                        preferred_element_type=jnp.float32)
                + slab_ref[r_b + 1 + i:r_b + 2 + i, :])

    # Head: only columns 0 (y1, raw) and 1 (sigmoid(y2)) of the HT-wide block
    # are nonzero; slice to 2 before the sigmoid so EUP work is 2 cols only.
    y = (jnp.dot(h, slab_ref[r_head:r_head + HT, :],
                 preferred_element_type=jnp.float32)
         + slab_ref[r_b + 4:r_b + 5, :])
    y2 = y[:, 0:2]
    sig_y, _ = stable_sigmoid(y2)
    out_col = jax.lax.broadcasted_iota(jnp.int32, (B, 2), 1)
    out_ref[...] = jnp.where(out_col == 0, y2, sig_y)


# --------------------------- parameter handling ----------------------------

def init_params(key, n_feature1, n_hidden1, n_feature2, n_hidden2):
    """Deterministic init mimicking torch.nn.Linear defaults:
    W, b ~ U(-1/sqrt(fan_in), 1/sqrt(fan_in)). PyTorch layout: W is (out, in)."""
    def linear_params(k, fan_in, fan_out):
        kw, kb = jax.random.split(k)
        bound = 1.0 / jnp.sqrt(float(fan_in))
        w = jax.random.uniform(kw, (fan_out, fan_in), jnp.float32, -bound, bound)
        b = jax.random.uniform(kb, (fan_out,), jnp.float32, -bound, bound)
        return w, b.reshape(1, fan_out)

    sizes1 = [(n_feature1, n_hidden1)] + [(n_hidden1, n_hidden1)] * 3 + [(n_hidden1, 1)]
    sizes2 = [(n_feature2, n_hidden2)] + [(n_hidden2, n_hidden2)] * 3 + [(n_hidden2, 1)]

    keys = jax.random.split(key, len(sizes1) + len(sizes2))
    params = []
    for k, (fi, fo) in zip(keys[:5], sizes1):
        params.extend(linear_params(k, fi, fo))
    for k, (fi, fo) in zip(keys[5:], sizes2):
        params.extend(linear_params(k, fi, fo))
    return params  # [w10,b10, ..., w1p,b1p, w20,b20, ..., w2p,b2p]


def pack_params(params, n_feature1, n_hidden1, n_feature2, n_hidden2):
    """Pack the 20 PyTorch-layout tensors into ONE (R, HT) f32 slab (done once,
    outside the hot path).  Row layout matches _fused_kernel."""
    (w10, b10, w11, b11, w12, b12, w13, b13, w1p, b1p,
     w20, b20, w21, b21, w22, b22, w23, b23, w2p, b2p) = params
    H1, H2 = n_hidden1, n_hidden2
    HT = H1 + H2
    F1, F2 = n_feature1, n_feature2
    F0p = _round_up(F1 + F2, 8)
    r_h = F0p
    r_head = F0p + 3 * HT
    r_b = r_head + HT
    R = r_b + 8

    slab = jnp.zeros((R, HT), jnp.float32)
    # layer 0: xsx rows feed the Swish columns, x rows feed the ELU columns.
    slab = slab.at[0:F1, :H1].set(w10.T)
    slab = slab.at[F1:F1 + F2, H1:].set(w20.T)
    # hidden layers 1..3 (block-diagonal, pre-transposed to (in, out)).
    for i, (wa, wb) in enumerate([(w11, w21), (w12, w22), (w13, w23)]):
        base = r_h + i * HT
        slab = slab.at[base:base + H1, :H1].set(wa.T)
        slab = slab.at[base + H1:base + HT, H1:].set(wb.T)
    # head: column 0 <- features1.predict, column 1 <- features2.predict.
    slab = slab.at[r_head:r_head + H1, 0].set(w1p[0])
    slab = slab.at[r_head + H1:r_head + HT, 1].set(w2p[0])
    # biases.
    slab = slab.at[r_b + 0].set(jnp.concatenate([b10[0], b20[0]]))
    slab = slab.at[r_b + 1].set(jnp.concatenate([b11[0], b21[0]]))
    slab = slab.at[r_b + 2].set(jnp.concatenate([b12[0], b22[0]]))
    slab = slab.at[r_b + 3].set(jnp.concatenate([b13[0], b23[0]]))
    slab = slab.at[r_b + 4, 0].set(b1p[0, 0])
    slab = slab.at[r_b + 4, 1].set(b2p[0, 0])
    return slab


# --------------------------------- wrappers ---------------------------------

def net_forward(xsx, x, slab, *, dims, approx_recip=False):
    """Single-net forward (original module semantics). Hot path = one pallas_call."""
    n_feature1, n_hidden1, n_feature2, n_hidden2 = dims
    B = xsx.shape[0]
    HT = n_hidden1 + n_hidden2
    F0p = _round_up(n_feature1 + n_feature2, 8)

    kernel = functools.partial(
        _fused_kernel, F1=n_feature1, F2=n_feature2, H1=n_hidden1, HT=HT,
        F0p=F0p, approx_recip=approx_recip)

    vmem = pl.BlockSpec(memory_space=pltpu.MemorySpace.VMEM)
    return pl.pallas_call(
        kernel,
        out_shape=jax.ShapeDtypeStruct((B, 2), jnp.float32),
        in_specs=[vmem, vmem, vmem],
        out_specs=vmem,
    )(xsx, x, slab)


def net_forward_particles(xsx, x, slabs, *, dims, approx_recip=True):
    """SVGD-style ensemble forward: slabs is (P, R, HT), one particle per grid
    step, parallel across TensorCores, slab DMAs auto double-buffered."""
    n_feature1, n_hidden1, n_feature2, n_hidden2 = dims
    B = xsx.shape[0]
    P, R, HT = slabs.shape
    F0p = _round_up(n_feature1 + n_feature2, 8)

    kernel = functools.partial(
        _fused_kernel, F1=n_feature1, F2=n_feature2, H1=n_hidden1, HT=HT,
        F0p=F0p, approx_recip=approx_recip)

    return pl.pallas_call(
        kernel,
        out_shape=jax.ShapeDtypeStruct((P, B, 2), jnp.float32),
        grid=(P,),
        in_specs=[
            pl.BlockSpec((B, n_feature1), lambda p: (0, 0)),   # shared data
            pl.BlockSpec((B, n_feature2), lambda p: (0, 0)),   # shared data
            pl.BlockSpec((None, R, HT), lambda p: (p, 0, 0)),  # per-particle slab
        ],
        out_specs=pl.BlockSpec((None, B, 2), lambda p: (p, 0, 0)),
        compiler_params=pltpu.CompilerParams(
            dimension_semantics=("parallel",)),
    )(xsx, x, slabs)


# -------------------------- pure-JAX reference -----------------------------

def _swish(x):
    return x * jax.nn.sigmoid(x)


def _elu(x):
    return jnp.where(x > 0, x, jnp.expm1(x))


def net_forward_ref(xsx, x, params):
    (w10, b10, w11, b11, w12, b12, w13, b13, w1p, b1p,
     w20, b20, w21, b21, w22, b22, w23, b23, w2p, b2p) = params
    h = xsx
    for w, b in [(w10, b10), (w11, b11), (w12, b12), (w13, b13)]:
        h = _swish(h @ w.T + b)
    y1 = h @ w1p.T + b1p
    g = x
    for w, b in [(w20, b20), (w21, b21), (w22, b22), (w23, b23)]:
        g = _elu(g @ w.T + b)
    y2 = g @ w2p.T + b2p
    return jnp.concatenate([y1, 1.0 / (1.0 + jnp.exp(-y2))], axis=1)


# ----------------------------------- main ----------------------------------

if __name__ == "__main__":
    B = 8
    n_feature1, n_hidden1 = 16, 32
    n_feature2, n_hidden2 = 12, 32
    dims = (n_feature1, n_hidden1, n_feature2, n_hidden2)

    key = jax.random.PRNGKey(0)
    k_xsx, k_x, k_params = jax.random.split(key, 3)
    xsx = jax.random.normal(k_xsx, (B, n_feature1), jnp.float32)
    x = jax.random.normal(k_x, (B, n_feature2), jnp.float32)

    # ---- single module (original Net.forward semantics), exact reciprocal ----
    params = init_params(k_params, *dims)
    slab = pack_params(params, *dims)                     # packed ONCE, not per call
    fwd = jax.jit(functools.partial(net_forward, dims=dims, approx_recip=False))
    out = jax.block_until_ready(fwd(xsx, x, slab))
    ref = net_forward_ref(xsx, x, params)
    assert out.shape == (B, 2), out.shape
    assert jnp.allclose(out, ref, atol=2e-5, rtol=2e-5), "mismatch vs JAX reference"

    # ---- SVGD particle grid (parallel axis, approx EUP reciprocal) ----
    P = 4
    pkeys = jax.random.split(k_params, P)
    plist = [init_params(k, *dims) for k in pkeys]
    slabs = jnp.stack([pack_params(p, *dims) for p in plist])   # (P, R, HT), once
    fwd_p = jax.jit(functools.partial(net_forward_particles, dims=dims,
                                      approx_recip=True))
    outs = jax.block_until_ready(fwd_p(xsx, x, slabs))
    refs = jnp.stack([net_forward_ref(xsx, x, p) for p in plist])
    assert outs.shape == (P, B, 2), outs.shape
    # Looser tolerance: approx EUP reciprocal in the hidden activations.
    assert jnp.allclose(outs, refs, atol=1e-2, rtol=1e-2), "mismatch (particles)"

    print("KERNEL_OK")
</pallas_src>

<mosaic_0001>
module attributes {stable_mosaic.version = 11 : i64} {
  func.func @_fused_kernel(%arg0: memref<8x16xf32, #tpu.memory_space<vmem>>, %arg1: memref<8x12xf32, #tpu.memory_space<vmem>>, %arg2: memref<296x64xf32, #tpu.memory_space<vmem>>, %arg3: memref<8x2xf32, #tpu.memory_space<vmem>>) attributes {dimension_semantics = [], scalar_prefetch = 0 : i64, scratch_operands = 0 : i64, tpu.core_type = #tpu.core_type<tc>} {
    %0 = tpu.iota {dimensions = array<i32: 1>} : vector<8x64xi32>
    %c32_i32 = arith.constant 32 : i32
    %1 = vector.broadcast %c32_i32 : i32 to vector<8x64xi32>
    %2 = arith.cmpi slt, %0, %1 : vector<8x64xi32>
    %c0 = arith.constant 0 : index
    %c0_0 = arith.constant 0 : index
    %3 = vector.load %arg0[%c0, %c0_0] : memref<8x16xf32, #tpu.memory_space<vmem>>, vector<8x16xf32>
    %c0_1 = arith.constant 0 : index
    %c0_2 = arith.constant 0 : index
    %4 = vector.load %arg1[%c0_1, %c0_2] : memref<8x12xf32, #tpu.memory_space<vmem>>, vector<8x12xf32>
    %cst = arith.constant 0.000000e+00 : f32
    %5 = vector.broadcast %cst : f32 to vector<8x4xf32>
    %6 = tpu.concatenate %3, %4, %5 in 1 : vector<8x16xf32>, vector<8x12xf32>, vector<8x4xf32> -> vector<8x32xf32>
    %c0_3 = arith.constant 0 : index
    %c0_4 = arith.constant 0 : index
    %7 = vector.load %arg2[%c0_3, %c0_4] : memref<296x64xf32, #tpu.memory_space<vmem>>, vector<32x64xf32>
    %cst_5 = arith.constant dense<0.000000e+00> : vector<8x64xf32>
    %8 = tpu.matmul %6, %7, %cst_5 {dimension_numbers = #tpu.dot_dimension_numbers<[1], [0], [0], [1], [0, 0, 1, 1], [], []>} : vector<8x32xf32>, vector<32x64xf32>, vector<8x64xf32> -> vector<8x64xf32>
    %c288 = arith.constant 288 : index
    %c0_6 = arith.constant 0 : index
    %9 = vector.load %arg2[%c288, %c0_6] : memref<296x64xf32, #tpu.memory_space<vmem>>, vector<1x64xf32>
    %10 = vector.broadcast %9 : vector<1x64xf32> to vector<8x64xf32>
    %11 = arith.addf %8, %10 : vector<8x64xf32>
    %12 = math.absf %11 : vector<8x64xf32>
    %cst_7 = arith.constant 0.000000e+00 : f32
    %13 = vector.broadcast %cst_7 : f32 to vector<8x64xf32>
    %14 = arith.subf %13, %12 : vector<8x64xf32>
    %15 = math.exp %14 : vector<8x64xf32>
    %cst_8 = arith.constant 1.000000e+00 : f32
    %16 = vector.broadcast %cst_8 : f32 to vector<8x64xf32>
    %17 = arith.addf %16, %15 : vector<8x64xf32>
    %18 = tpu.reciprocal %17 : vector<8x64xf32> -> vector<8x64xf32>
    %cst_9 = arith.constant 0.000000e+00 : f32
    %19 = vector.broadcast %cst_9 : f32 to vector<8x64xf32>
    %20 = arith.cmpf oge, %11, %19 : vector<8x64xf32>
    %21 = arith.mulf %15, %18 : vector<8x64xf32>
    %22 = arith.select %20, %18, %21 : vector<8x64xi1>, vector<8x64xf32>
    %23 = arith.mulf %11, %22 : vector<8x64xf32>
    %cst_10 = arith.constant 0.000000e+00 : f32
    %24 = vector.broadcast %cst_10 : f32 to vector<8x64xf32>
    %25 = arith.cmpf ogt, %11, %24 : vector<8x64xf32>
    %cst_11 = arith.constant 1.000000e+00 : f32
    %26 = vector.broadcast %cst_11 : f32 to vector<8x64xf32>
    %27 = arith.subf %15, %26 : vector<8x64xf32>
    %28 = arith.select %25, %11, %27 : vector<8x64xi1>, vector<8x64xf32>
    %29 = arith.select %2, %23, %28 : vector<8x64xi1>, vector<8x64xf32>
    %c32 = arith.constant 32 : index
    %c0_12 = arith.constant 0 : index
    %30 = vector.load %arg2[%c32, %c0_12] : memref<296x64xf32, #tpu.memory_space<vmem>>, vector<64x64xf32>
    %cst_13 = arith.constant dense<0.000000e+00> : vector<8x64xf32>
    %31 = tpu.matmul %29, %30, %cst_13 {dimension_numbers = #tpu.dot_dimension_numbers<[1], [0], [0], [1], [0, 0, 1, 1], [], []>} : vector<8x64xf32>, vector<64x64xf32>, vector<8x64xf32> -> vector<8x64xf32>
    %c289 = arith.constant 289 : index
    %c0_14 = arith.constant 0 : index
    %32 = vector.load %arg2[%c289, %c0_14] : memref<296x64xf32, #tpu.memory_space<vmem>>, vector<1x64xf32>
    %33 = vector.broadcast %32 : vector<1x64xf32> to vector<8x64xf32>
    %34 = arith.addf %31, %33 : vector<8x64xf32>
    %35 = math.absf %34 : vector<8x64xf32>
    %cst_15 = arith.constant 0.000000e+00 : f32
    %36 = vector.broadcast %cst_15 : f32 to vector<8x64xf32>
    %37 = arith.subf %36, %35 : vector<8x64xf32>
    %38 = math.exp %37 : vector<8x64xf32>
    %cst_16 = arith.constant 1.000000e+00 : f32
    %39 = vector.broadcast %cst_16 : f32 to vector<8x64xf32>
    %40 = arith.addf %39, %38 : vector<8x64xf32>
    %41 = tpu.reciprocal %40 : vector<8x64xf32> -> vector<8x64xf32>
    %cst_17 = arith.constant 0.000000e+00 : f32
    %42 = vector.broadcast %cst_17 : f32 to vector<8x64xf32>
    %43 = arith.cmpf oge, %34, %42 : vector<8x64xf32>
    %44 = arith.mulf %38, %41 : vector<8x64xf32>
    %45 = arith.select %43, %41, %44 : vector<8x64xi1>, vector<8x64xf32>
    %46 = arith.mulf %34, %45 : vector<8x64xf32>
    %cst_18 = arith.constant 0.000000e+00 : f32
    %47 = vector.broadcast %cst_18 : f32 to vector<8x64xf32>
    %48 = arith.cmpf ogt, %34, %47 : vector<8x64xf32>
    %cst_19 = arith.constant 1.000000e+00 : f32
    %49 = vector.broadcast %cst_19 : f32 to vector<8x64xf32>
    %50 = arith.subf %38, %49 : vector<8x64xf32>
    %51 = arith.select %48, %34, %50 : vector<8x64xi1>, vector<8x64xf32>
    %52 = arith.select %2, %46, %51 : vector<8x64xi1>, vector<8x64xf32>
    %c96 = arith.constant 96 : index
    %c0_20 = arith.constant 0 : index
    %53 = vector.load %arg2[%c96, %c0_20] : memref<296x64xf32, #tpu.memory_space<vmem>>, vector<64x64xf32>
    %cst_21 = arith.constant dense<0.000000e+00> : vector<8x64xf32>
    %54 = tpu.matmul %52, %53, %cst_21 {dimension_numbers = #tpu.dot_dimension_numbers<[1], [0], [0], [1], [0, 0, 1, 1], [], []>} : vector<8x64xf32>, vector<64x64xf32>, vector<8x64xf32> -> vector<8x64xf32>
    %c290 = arith.constant 290 : index
    %c0_22 = arith.constant 0 : index
    %55 = vector.load %arg2[%c290, %c0_22] : memref<296x64xf32, #tpu.memory_space<vmem>>, vector<1x64xf32>
    %56 = vector.broadcast %55 : vector<1x64xf32> to vector<8x64xf32>
    %57 = arith.addf %54, %56 : vector<8x64xf32>
    %58 = math.absf %57 : vector<8x64xf32>
    %cst_23 = arith.constant 0.000000e+00 : f32
    %59 = vector.broadcast %cst_23 : f32 to vector<8x64xf32>
    %60 = arith.subf %59, %58 : vector<8x64xf32>
    %61 = math.exp %60 : vector<8x64xf32>
    %cst_24 = arith.constant 1.000000e+00 : f32
    %62 = vector.broadcast %cst_24 : f32 to vector<8x64xf32>
    %63 = arith.addf %62, %61 : vector<8x64xf32>
    %64 = tpu.reciprocal %63 : vector<8x64xf32> -> vector<8x64xf32>
    %cst_25 = arith.constant 0.000000e+00 : f32
    %65 = vector.broadcast %cst_25 : f32 to vector<8x64xf32>
    %66 = arith.cmpf oge, %57, %65 : vector<8x64xf32>
    %67 = arith.mulf %61, %64 : vector<8x64xf32>
    %68 = arith.select %66, %64, %67 : vector<8x64xi1>, vector<8x64xf32>
    %69 = arith.mulf %57, %68 : vector<8x64xf32>
    %cst_26 = arith.constant 0.000000e+00 : f32
    %70 = vector.broadcast %cst_26 : f32 to vector<8x64xf32>
    %71 = arith.cmpf ogt, %57, %70 : vector<8x64xf32>
    %cst_27 = arith.constant 1.000000e+00 : f32
    %72 = vector.broadcast %cst_27 : f32 to vector<8x64xf32>
    %73 = arith.subf %61, %72 : vector<8x64xf32>
    %74 = arith.select %71, %57, %73 : vector<8x64xi1>, vector<8x64xf32>
    %75 = arith.select %2, %69, %74 : vector<8x64xi1>, vector<8x64xf32>
    %c160 = arith.constant 160 : index
    %c0_28 = arith.constant 0 : index
    %76 = vector.load %arg2[%c160, %c0_28] : memref<296x64xf32, #tpu.memory_space<vmem>>, vector<64x64xf32>
    %cst_29 = arith.constant dense<0.000000e+00> : vector<8x64xf32>
    %77 = tpu.matmul %75, %76, %cst_29 {dimension_numbers = #tpu.dot_dimension_numbers<[1], [0], [0], [1], [0, 0, 1, 1], [], []>} : vector<8x64xf32>, vector<64x64xf32>, vector<8x64xf32> -> vector<8x64xf32>
    %c291 = arith.constant 291 : index
    %c0_30 = arith.constant 0 : index
    %78 = vector.load %arg2[%c291, %c0_30] : memref<296x64xf32, #tpu.memory_space<vmem>>, vector<1x64xf32>
    %79 = vector.broadcast %78 : vector<1x64xf32> to vector<8x64xf32>
    %80 = arith.addf %77, %79 : vector<8x64xf32>
    %81 = math.absf %80 : vector<8x64xf32>
    %cst_31 = arith.constant 0.000000e+00 : f32
    %82 = vector.broadcast %cst_31 : f32 to vector<8x64xf32>
    %83 = arith.subf %82, %81 : vector<8x64xf32>
    %84 = math.exp %83 : vector<8x64xf32>
    %cst_32 = arith.constant 1.000000e+00 : f32
    %85 = vector.broadcast %cst_32 : f32 to vector<8x64xf32>
    %86 = arith.addf %85, %84 : vector<8x64xf32>
    %87 = tpu.reciprocal %86 : vector<8x64xf32> -> vector<8x64xf32>
    %cst_33 = arith.constant 0.000000e+00 : f32
    %88 = vector.broadcast %cst_33 : f32 to vector<8x64xf32>
    %89 = arith.cmpf oge, %80, %88 : vector<8x64xf32>
    %90 = arith.mulf %84, %87 : vector<8x64xf32>
    %91 = arith.select %89, %87, %90 : vector<8x64xi1>, vector<8x64xf32>
    %92 = arith.mulf %80, %91 : vector<8x64xf32>
    %cst_34 = arith.constant 0.000000e+00 : f32
    %93 = vector.broadcast %cst_34 : f32 to vector<8x64xf32>
    %94 = arith.cmpf ogt, %80, %93 : vector<8x64xf32>
    %cst_35 = arith.constant 1.000000e+00 : f32
    %95 = vector.broadcast %cst_35 : f32 to vector<8x64xf32>
    %96 = arith.subf %84, %95 : vector<8x64xf32>
    %97 = arith.select %94, %80, %96 : vector<8x64xi1>, vector<8x64xf32>
    %98 = arith.select %2, %92, %97 : vector<8x64xi1>, vector<8x64xf32>
    %c224 = arith.constant 224 : index
    %c0_36 = arith.constant 0 : index
    %99 = vector.load %arg2[%c224, %c0_36] : memref<296x64xf32, #tpu.memory_space<vmem>>, vector<64x64xf32>
    %cst_37 = arith.constant dense<0.000000e+00> : vector<8x64xf32>
    %100 = tpu.matmul %98, %99, %cst_37 {dimension_numbers = #tpu.dot_dimension_numbers<[1], [0], [0], [1], [0, 0, 1, 1], [], []>} : vector<8x64xf32>, vector<64x64xf32>, vector<8x64xf32> -> vector<8x64xf32>
    %c292 = arith.constant 292 : index
    %c0_38 = arith.constant 0 : index
    %101 = vector.load %arg2[%c292, %c0_38] : memref<296x64xf32, #tpu.memory_space<vmem>>, vector<1x64xf32>
    %102 = vector.broadcast %101 : vector<1x64xf32> to vector<8x64xf32>
    %103 = arith.addf %100, %102 : vector<8x64xf32>
    %104 = vector.extract_strided_slice %103 {offsets = [0, 0], sizes = [8, 2], strides = [1, 1]} : vector<8x64xf32> to vector<8x2xf32>
    %105 = math.absf %104 : vector<8x2xf32>
    %cst_39 = arith.constant 0.000000e+00 : f32
    %106 = vector.broadcast %cst_39 : f32 to vector<8x2xf32>
    %107 = arith.subf %106, %105 : vector<8x2xf32>
    %108 = math.exp %107 : vector<8x2xf32>
    %cst_40 = arith.constant 1.000000e+00 : f32
    %109 = vector.broadcast %cst_40 : f32 to vector<8x2xf32>
    %110 = arith.addf %109, %108 : vector<8x2xf32>
    %111 = tpu.reciprocal %110 : vector<8x2xf32> -> vector<8x2xf32>
    %cst_41 = arith.constant 0.000000e+00 : f32
    %112 = vector.broadcast %cst_41 : f32 to vector<8x2xf32>
    %113 = arith.cmpf oge, %104, %112 : vector<8x2xf32>
    %114 = arith.mulf %108, %111 : vector<8x2xf32>
    %115 = arith.select %113, %111, %114 : vector<8x2xi1>, vector<8x2xf32>
    %116 = tpu.iota {dimensions = array<i32: 1>} : vector<8x2xi32>
    %c0_i32 = arith.constant 0 : i32
    %117 = vector.broadcast %c0_i32 : i32 to vector<8x2xi32>
    %118 = arith.cmpi eq, %116, %117 : vector<8x2xi32>
    %119 = arith.select %118, %104, %115 : vector<8x2xi1>, vector<8x2xf32>
    %c0_42 = arith.constant 0 : index
    %c0_43 = arith.constant 0 : index
    %120 = vector.load %arg3[%c0_42, %c0_43] : memref<8x2xf32, #tpu.memory_space<vmem>>, vector<8x2xf32>
    tpu.vector_store %arg3[%c0_42, %c0_43], %119 {strides = array<i32>} : memref<8x2xf32, #tpu.memory_space<vmem>>, vector<8x2xf32>,
    return
  }
}

</mosaic_0001>

<llo_original>
// kernel: net_forward.1
$region0: #{net_forward.1}
  #allocation0 [shape = 'u32[]', space=smem, size = 0x4, offset = 0x4, fixed_abs, tag = 'smem constant byte address 0x4 - core index']
  #allocation1 [shape = 'u32[144,128]{1,0:T(1,128)}', space=vmem, size = 0x12000, scoped, tag = 'internal scratch']
  %s0 = inlined_call_operand.vmem [shape: f32[8,16], index: 0, kind: input, shape index: {}]
  %s1 = inlined_call_operand.vmem [shape: f32[8,12], index: 1, kind: input, shape index: {}]
  %s2 = inlined_call_operand.vmem [shape: f32[296,64], index: 2, kind: input, shape index: {}]
  %s3 = inlined_call_operand.vmem [shape: f32[8,2], index: 3, kind: output, shape index: {}]
  %s4 = sld [smem:[#allocation0]]
  $region22: #{net_forward.1} parent=0
    _
  %s6 = ssub.s32 1, %s4
  %s7 = scalar_select 0, %s6, %s4
  // Predicated region
  $region2: #{net_forward.1} parent=0 // pred_check
    _
  $region3: #{net_forward.1} parent=0 // pred_check_branch
    %9 = sbr.rel (0) target = $region5
  $region4: #{net_forward.1} parent=0 // pred_region
    _
  $region5: #{net_forward.1} parent=0 // pred_fallthru
    _
  // Predicated region
  $region6: #{net_forward.1} parent=0 // pred_check
    _
  $region7: #{net_forward.1} parent=0 // pred_check_branch
    %11 = sbr.rel (0) target = $region9
  $region8: #{net_forward.1} parent=0 // pred_region
    _
  $region9: #{net_forward.1} parent=0 // pred_fallthru
    _
  // Predicated region
  $region10: #{net_forward.1} parent=0 // pred_check
    _
  $region11: #{net_forward.1} parent=0 // pred_check_branch
    %13 = sbr.rel (0) target = $region13
  $region12: #{net_forward.1} parent=0 // pred_region
    _
  $region13: #{net_forward.1} parent=0 // pred_fallthru
    _
  %v14 = vlaneseq
  %v15 = vand.u32 %v14, 127
  %vm16 = vcmp.lt.s32.totalorder %v15, 32
  %v17 = vld [vmem:[%s0] sm:$0xff]
  %v18 = vld [vmem:[%s1] sm:$0xff]
  %20 = vrot.lane.b32.xlu0 %v18, 16
  %v21 = vpop.permute.xlu0 %20
  %vm23 = vcmask 130048
  %v24 = vsel %vm23, %v17, %v21
  %vm25 = vcmask 228352
  %v26 = vsel %vm25, %v24, 0.0
  %v27 = vld [vmem:[%s2] sm:$0xff]
  %v28 = vld [vmem:[%s2 + $0x8] sm:$0xff]
  %v29 = vld [vmem:[%s2 + $0x10] sm:$0xff]
  %v30 = vld [vmem:[%s2 + $0x18] sm:$0xff]
  %v31 = vld [vmem:[%s2 + $0x120] sm:$0x1]
  %v32 = vlaneseq
  %v33 = vshrl.u32 %v32, 7
  %v34 = vsub.s32 0, %v33
  %v35 = vrot.slane %v31, %v34
  %vm36 = vcmask 261120
  %v38 = vsel %vm36, %v26, 0
  %40 = vmatprep.subr.mxu0 0.0
  %41 = vmatpush1.msra.mxu0 %v27
  %42 = vmatprep.subr.mxu0 0.0
  %43 = vmatpush1.msra.mxu0 %v28
  %44 = vmatprep.subr.mxu0 0.0
  %45 = vmatpush1.msra.mxu0 %v29
  %46 = vmatprep.subr.mxu0 0.0
  %47 = vmatpush1.msra.mxu0 %v30
  %48 = vmatprep.subr.mxu0 0.0
  %49 = vmatpush1.msra.mxu0 0.0
  %50 = vmatprep.subr.mxu0 0.0
  %51 = vmatpush1.msra.mxu0 0.0
  %52 = vmatprep.subr.mxu0 0.0
  %53 = vmatpush1.msra.mxu0 0.0
  %54 = vmatprep.subr.mxu0 0.0
  %55 = vmatpush1.msra.mxu0 0.0
  %56 = vmatprep.subr.mxu0 0.0
  %57 = vmatpush1.msra.mxu0 0.0
  %58 = vmatprep.subr.mxu0 0.0
  %59 = vmatpush1.msra.mxu0 0.0
  %60 = vmatprep.subr.mxu0 0.0
  %61 = vmatpush1.msra.mxu0 0.0
  %62 = vmatprep.subr.mxu0 0.0
  %63 = vmatpush1.msra.mxu0 0.0
  %64 = vmatprep.subr.mxu0 0.0
  %65 = vmatpush1.msra.mxu0 0.0
  %66 = vmatprep.subr.mxu0 0.0
  %67 = vmatpush1.msra.mxu0 0.0
  %68 = vmatprep.subr.mxu0 0.0
  %69 = vmatpush1.msra.mxu0 0.0
  %70 = vmatprep.subr.mxu0 0.0
  %71 = vmatpush1.msra.mxu0 0.0
  %72 = vmatprep.subr.mxu0 0.0
  %73 = vmatpush1.msra.mxu0 0.0
  %74 = vmatprep.subr.mxu0 0.0
  %75 = vmatpush1.msra.mxu0 0.0
  %76 = vmatprep.subr.mxu0 0.0
  %77 = vmatpush1.msra.mxu0 0.0
  %78 = vmatprep.subr.mxu0 0.0
  %79 = vmatpush1.msra.mxu0 0.0
  %80 = vmatprep.subr.mxu0 0.0
  %81 = vmatpush1.msra.mxu0 0.0
  %82 = vmatprep.subr.mxu0 0.0
  %83 = vmatpush1.msra.mxu0 0.0
  %84 = vmatprep.subr.mxu0 0.0
  %85 = vmatpush1.msra.mxu0 0.0
  %86 = vmatprep.subr.mxu0 0.0
  %87 = vmatpush1.msra.mxu0 0.0
  %88 = vmatprep.subr.mxu0 0.0
  %89 = vmatpush1.msra.mxu0 0.0
  %90 = vmatprep.subr.mxu0 0.0
  %91 = vmatpush1.msra.mxu0 0.0
  %92 = vmatprep.subr.mxu0 0.0
  %93 = vmatpush1.msra.mxu0 0.0
  %94 = vmatprep.subr.mxu0 0.0
  %95 = vmatpush1.msra.mxu0 0.0
  %96 = vmatprep.subr.mxu0 0.0
  %97 = vmatpush1.msra.mxu0 0.0
  %98 = vmatprep.subr.mxu0 0.0
  %99 = vmatpush1.msra.mxu0 0.0
  %100 = vmatprep.subr.mxu0 0.0
  %101 = vmatpush1.msra.mxu0 0.0
  %102 = vmatprep.subr.mxu0 0.0
  %103 = vmatpush1.msra.mxu0 0.0
  %104 = vmatprep.mubr.f32.mxu0 0.0
  %105 = vmatmul.mubr.f32.gmra.mrb[0].mxu0 %v38
  %v106 = vpop.f32.mrb[0].mxu0
  %v107 = vadd.f32 %v35, %v106
  %v108 = vpop.f32.mrb[0].mxu0
  %109 = vdwg.mxu0
  %v110 = vand.u32 2147483647, %v107
  %v111 = vsub.f32 0.0, %v110
  %v112 = vmul.f32 %v111, 1.442695
  %v113 = vpow.pop %v112
  %v114 = vadd.f32 %v113, 1.0
  %v115 = vrcp.pop %v114
  %vm116 = vcmp.ge.f32.partialorder %v107, 0.0
  %v117 = vmul.f32 %v113, %v115
  %v118 = vsel %vm116, %v115, %v117
  %v119 = vmul.f32 %v107, %v118
  %vm120 = vcmp.gt.f32.partialorder %v107, 0.0
  %v121 = vsub.f32 %v113, 1.0
  %v122 = vsel %vm120, %v107, %v121
  %v123 = vsel %vm16, %v119, %v122
  %v124 = vld [vmem:[%s2 + $0x20] sm:$0xff]
  %v125 = vld [vmem:[%s2 + $0x28] sm:$0xff]
  %v126 = vld [vmem:[%s2 + $0x30] sm:$0xff]
  %v127 = vld [vmem:[%s2 + $0x38] sm:$0xff]
  %v128 = vld [vmem:[%s2 + $0x40] sm:$0xff]
  %v129 = vld [vmem:[%s2 + $0x48] sm:$0xff]
  %v130 = vld [vmem:[%s2 + $0x50] sm:$0xff]
  %v131 = vld [vmem:[%s2 + $0x58] sm:$0xff]
  %v132 = vld [vmem:[%s2 + $0x121] sm:$0x1]
  %v133 = vlaneseq
  %v134 = vshrl.u32 %v133, 7
  %v135 = vsub.s32 0, %v134
  %v136 = vrot.slane %v132, %v135
  %vm137 = vcmask 523264
  %v139 = vsel %vm137, %v123, 0
  %141 = vmatprep.subr.mxu0 0.0
  %142 = vmatpush1.msra.mxu0 %v124
  %143 = vmatprep.subr.mxu0 0.0
  %144 = vmatpush1.msra.mxu0 %v125
  %145 = vmatprep.subr.mxu0 0.0
  %146 = vmatpush1.msra.mxu0 %v126
  %147 = vmatprep.subr.mxu0 0.0
  %148 = vmatpush1.msra.mxu0 %v127
  %149 = vmatprep.subr.mxu0 0.0
  %150 = vmatpush1.msra.mxu0 %v128
  %151 = vmatprep.subr.mxu0 0.0
  %152 = vmatpush1.msra.mxu0 %v129
  %153 = vmatprep.subr.mxu0 0.0
  %154 = vmatpush1.msra.mxu0 %v130
  %155 = vmatprep.subr.mxu0 0.0
  %156 = vmatpush1.msra.mxu0 %v131
  %157 = vmatprep.subr.mxu0 0.0
  %158 = vmatpush1.msra.mxu0 0.0
  %159 = vmatprep.subr.mxu0 0.0
  %160 = vmatpush1.msra.mxu0 0.0
  %161 = vmatprep.subr.mxu0 0.0
  %162 = vmatpush1.msra.mxu0 0.0
  %163 = vmatprep.subr.mxu0 0.0
  %164 = vmatpush1.msra.mxu0 0.0
  %165 = vmatprep.subr.mxu0 0.0
  %166 = vmatpush1.msra.mxu0 0.0
  %167 = vmatprep.subr.mxu0 0.0
  %168 = vmatpush1.msra.mxu0 0.0
  %169 = vmatprep.subr.mxu0 0.0
  %170 = vmatpush1.msra.mxu0 0.0
  %171 = vmatprep.subr.mxu0 0.0
  %172 = vmatpush1.msra.mxu0 0.0
  %173 = vmatprep.subr.mxu0 0.0
  %174 = vmatpush1.msra.mxu0 0.0
  %175 = vmatprep.subr.mxu0 0.0
  %176 = vmatpush1.msra.mxu0 0.0
  %177 = vmatprep.subr.mxu0 0.0
  %178 = vmatpush1.msra.mxu0 0.0
  %179 = vmatprep.subr.mxu0 0.0
  %180 = vmatpush1.msra.mxu0 0.0
  %181 = vmatprep.subr.mxu0 0.0
  %182 = vmatpush1.msra.mxu0 0.0
  %183 = vmatprep.subr.mxu0 0.0
  %184 = vmatpush1.msra.mxu0 0.0
  %185 = vmatprep.subr.mxu0 0.0
  %186 = vmatpush1.msra.mxu0 0.0
  %187 = vmatprep.subr.mxu0 0.0
  %188 = vmatpush1.msra.mxu0 0.0
  %189 = vmatprep.subr.mxu0 0.0
  %190 = vmatpush1.msra.mxu0 0.0
  %191 = vmatprep.subr.mxu0 0.0
  %192 = vmatpush1.msra.mxu0 0.0
  %193 = vmatprep.subr.mxu0 0.0
  %194 = vmatpush1.msra.mxu0 0.0
  %195 = vmatprep.subr.mxu0 0.0
  %196 = vmatpush1.msra.mxu0 0.0
  %197 = vmatprep.subr.mxu0 0.0
  %198 = vmatpush1.msra.mxu0 0.0
  %199 = vmatprep.subr.mxu0 0.0
  %200 = vmatpush1.msra.mxu0 0.0
  %201 = vmatprep.subr.mxu0 0.0
  %202 = vmatpush1.msra.mxu0 0.0
  %203 = vmatprep.subr.mxu0 0.0
  %204 = vmatpush1.msra.mxu0 0.0
  %205 = vmatprep.mubr.f32.mxu0 0.0
  %206 = vmatmul.mubr.f32.gmra.mrb[0].mxu0 %v139
  %v207 = vpop.f32.mrb[0].mxu0
  %v208 = vadd.f32 %v136, %v207
  %v209 = vpop.f32.mrb[0].mxu0
  %210 = vdwg.mxu0
  %v211 = vand.u32 2147483647, %v208
  %v212 = vsub.f32 0.0, %v211
  %v213 = vmul.f32 %v212, 1.442695
  %v214 = vpow.pop %v213
  %v215 = vadd.f32 %v214, 1.0
  %v216 = vrcp.pop %v215
  %vm217 = vcmp.ge.f32.partialorder %v208, 0.0
  %v218 = vmul.f32 %v214, %v216
  %v219 = vsel %vm217, %v216, %v218
  %v220 = vmul.f32 %v208, %v219
  %vm221 = vcmp.gt.f32.partialorder %v208, 0.0
  %v222 = vsub.f32 %v214, 1.0
  %v223 = vsel %vm221, %v208, %v222
  %v224 = vsel %vm16, %v220, %v223
  %v225 = vld [vmem:[%s2 + $0x60] sm:$0xff]
  %v226 = vld [vmem:[%s2 + $0x68] sm:$0xff]
  %v227 = vld [vmem:[%s2 + $0x70] sm:$0xff]
  %v228 = vld [vmem:[%s2 + $0x78] sm:$0xff]
  %v229 = vld [vmem:[%s2 + $0x80] sm:$0xff]
  %v230 = vld [vmem:[%s2 + $0x88] sm:$0xff]
  %v231 = vld [vmem:[%s2 + $0x90] sm:$0xff]
  %v232 = vld [vmem:[%s2 + $0x98] sm:$0xff]
  %v233 = vld [vmem:[%s2 + $0x122] sm:$0x1]
  %v234 = vlaneseq
  %v235 = vshrl.u32 %v234, 7
  %v236 = vsub.s32 0, %v235
  %v237 = vrot.slane %v233, %v236
  %v239 = vsel %vm137, %v224, 0
  %241 = vmatprep.subr.mxu0 0.0
  %242 = vmatpush1.msra.mxu0 %v225
  %243 = vmatprep.subr.mxu0 0.0
  %244 = vmatpush1.msra.mxu0 %v226
  %245 = vmatprep.subr.mxu0 0.0
  %246 = vmatpush1.msra.mxu0 %v227
  %247 = vmatprep.subr.mxu0 0.0
  %248 = vmatpush1.msra.mxu0 %v228
  %249 = vmatprep.subr.mxu0 0.0
  %250 = vmatpush1.msra.mxu0 %v229
  %251 = vmatprep.subr.mxu0 0.0
  %252 = vmatpush1.msra.mxu0 %v230
  %253 = vmatprep.subr.mxu0 0.0
  %254 = vmatpush1.msra.mxu0 %v231
  %255 = vmatprep.subr.mxu0 0.0
  %256 = vmatpush1.msra.mxu0 %v232
  %257 = vmatprep.subr.mxu0 0.0
  %258 = vmatpush1.msra.mxu0 0.0
  %259 = vmatprep.subr.mxu0 0.0
  %260 = vmatpush1.msra.mxu0 0.0
  %261 = vmatprep.subr.mxu0 0.0
  %262 = vmatpush1.msra.mxu0 0.0
  %263 = vmatprep.subr.mxu0 0.0
  %264 = vmatpush1.msra.mxu0 0.0
  %265 = vmatprep.subr.mxu0 0.0
  %266 = vmatpush1.msra.mxu0 0.0
  %267 = vmatprep.subr.mxu0 0.0
  %268 = vmatpush1.msra.mxu0 0.0
  %269 = vmatprep.subr.mxu0 0.0
  %270 = vmatpush1.msra.mxu0 0.0
  %271 = vmatprep.subr.mxu0 0.0
  %272 = vmatpush1.msra.mxu0 0.0
  %273 = vmatprep.subr.mxu0 0.0
  %274 = vmatpush1.msra.mxu0 0.0
  %275 = vmatprep.subr.mxu0 0.0
  %276 = vmatpush1.msra.mxu0 0.0
  %277 = vmatprep.subr.mxu0 0.0
  %278 = vmatpush1.msra.mxu0 0.0
  %279 = vmatprep.subr.mxu0 0.0
  %280 = vmatpush1.msra.mxu0 0.0
  %281 = vmatprep.subr.mxu0 0.0
  %282 = vmatpush1.msra.mxu0 0.0
  %283 = vmatprep.subr.mxu0 0.0
  %284 = vmatpush1.msra.mxu0 0.0
  %285 = vmatprep.subr.mxu0 0.0
  %286 = vmatpush1.msra.mxu0 0.0
  %287 = vmatprep.subr.mxu0 0.0
  %288 = vmatpush1.msra.mxu0 0.0
  %289 = vmatprep.subr.mxu0 0.0
  %290 = vmatpush1.msra.mxu0 0.0
  %291 = vmatprep.subr.mxu0 0.0
  %292 = vmatpush1.msra.mxu0 0.0
  %293 = vmatprep.subr.mxu0 0.0
  %294 = vmatpush1.msra.mxu0 0.0
  %295 = vmatprep.subr.mxu0 0.0
  %296 = vmatpush1.msra.mxu0 0.0
  %297 = vmatprep.subr.mxu0 0.0
  %298 = vmatpush1.msra.mxu0 0.0
  %299 = vmatprep.subr.mxu0 0.0
  %300 = vmatpush1.msra.mxu0 0.0
  %301 = vmatprep.subr.mxu0 0.0
  %302 = vmatpush1.msra.mxu0 0.0
  %303 = vmatprep.subr.mxu0 0.0
  %304 = vmatpush1.msra.mxu0 0.0
  %305 = vmatprep.mubr.f32.mxu0 0.0
  %306 = vmatmul.mubr.f32.gmra.mrb[0].mxu0 %v239
  %v307 = vpop.f32.mrb[0].mxu0
  %v308 = vadd.f32 %v237, %v307
  %v309 = vpop.f32.mrb[0].mxu0
  %310 = vdwg.mxu0
  %v311 = vand.u32 2147483647, %v308
  %v312 = vsub.f32 0.0, %v311
  %v313 = vmul.f32 %v312, 1.442695
  %v314 = vpow.pop %v313
  %v315 = vadd.f32 %v314, 1.0
  %v316 = vrcp.pop %v315
  %vm317 = vcmp.ge.f32.partialorder %v308, 0.0
  %v318 = vmul.f32 %v314, %v316
  %v319 = vsel %vm317, %v316, %v318
  %v320 = vmul.f32 %v308, %v319
  %vm321 = vcmp.gt.f32.partialorder %v308, 0.0
  %v322 = vsub.f32 %v314, 1.0
  %v323 = vsel %vm321, %v308, %v322
  %v324 = vsel %vm16, %v320, %v323
  %v325 = vld [vmem:[%s2 + $0xa0] sm:$0xff]
  %v326 = vld [vmem:[%s2 + $0xa8] sm:$0xff]
  %v327 = vld [vmem:[%s2 + $0xb0] sm:$0xff]
  %v328 = vld [vmem:[%s2 + $0xb8] sm:$0xff]
  %v329 = vld [vmem:[%s2 + $0xc0] sm:$0xff]
  %v330 = vld [vmem:[%s2 + $0xc8] sm:$0xff]
  %v331 = vld [vmem:[%s2 + $0xd0] sm:$0xff]
  %v332 = vld [vmem:[%s2 + $0xd8] sm:$0xff]
  %v333 = vld [vmem:[%s2 + $0x123] sm:$0x1]
  %v334 = vlaneseq
  %v335 = vshrl.u32 %v334, 7
  %v336 = vsub.s32 0, %v335
  %v337 = vrot.slane %v333, %v336
  %v339 = vsel %vm137, %v324, 0
  %341 = vmatprep.subr.mxu0 0.0
  %342 = vmatpush1.msra.mxu0 %v325
  %343 = vmatprep.subr.mxu0 0.0
  %344 = vmatpush1.msra.mxu0 %v326
  %345 = vmatprep.subr.mxu0 0.0
  %346 = vmatpush1.msra.mxu0 %v327
  %347 = vmatprep.subr.mxu0 0.0
  %348 = vmatpush1.msra.mxu0 %v328
  %349 = vmatprep.subr.mxu0 0.0
  %350 = vmatpush1.msra.mxu0 %v329
  %351 = vmatprep.subr.mxu0 0.0
  %352 = vmatpush1.msra.mxu0 %v330
  %353 = vmatprep.subr.mxu0 0.0
  %354 = vmatpush1.msra.mxu0 %v331
  %355 = vmatprep.subr.mxu0 0.0
  %356 = vmatpush1.msra.mxu0 %v332
  %357 = vmatprep.subr.mxu0 0.0
  %358 = vmatpush1.msra.mxu0 0.0
  %359 = vmatprep.subr.mxu0 0.0
  %360 = vmatpush1.msra.mxu0 0.0
  %361 = vmatprep.subr.mxu0 0.0
  %362 = vmatpush1.msra.mxu0 0.0
  %363 = vmatprep.subr.mxu0 0.0
  %364 = vmatpush1.msra.mxu0 0.0
  %365 = vmatprep.subr.mxu0 0.0
  %366 = vmatpush1.msra.mxu0 0.0
  %367 = vmatprep.subr.mxu0 0.0
  %368 = vmatpush1.msra.mxu0 0.0
  %369 = vmatprep.subr.mxu0 0.0
  %370 = vmatpush1.msra.mxu0 0.0
  %371 = vmatprep.subr.mxu0 0.0
  %372 = vmatpush1.msra.mxu0 0.0
  %373 = vmatprep.subr.mxu0 0.0
  %374 = vmatpush1.msra.mxu0 0.0
  %375 = vmatprep.subr.mxu0 0.0
  %376 = vmatpush1.msra.mxu0 0.0
  %377 = vmatprep.subr.mxu0 0.0
  %378 = vmatpush1.msra.mxu0 0.0
  %379 = vmatprep.subr.mxu0 0.0
  %380 = vmatpush1.msra.mxu0 0.0
  %381 = vmatprep.subr.mxu0 0.0
  %382 = vmatpush1.msra.mxu0 0.0
  %383 = vmatprep.subr.mxu0 0.0
  %384 = vmatpush1.msra.mxu0 0.0
  %385 = vmatprep.subr.mxu0 0.0
  %386 = vmatpush1.msra.mxu0 0.0
  %387 = vmatprep.subr.mxu0 0.0
  %388 = vmatpush1.msra.mxu0 0.0
  %389 = vmatprep.subr.mxu0 0.0
  %390 = vmatpush1.msra.mxu0 0.0
  %391 = vmatprep.subr.mxu0 0.0
  %392 = vmatpush1.msra.mxu0 0.0
  %393 = vmatprep.subr.mxu0 0.0
  %394 = vmatpush1.msra.mxu0 0.0
  %395 = vmatprep.subr.mxu0 0.0
  %396 = vmatpush1.msra.mxu0 0.0
  %397 = vmatprep.subr.mxu0 0.0
  %398 = vmatpush1.msra.mxu0 0.0
  %399 = vmatprep.subr.mxu0 0.0
  %400 = vmatpush1.msra.mxu0 0.0
  %401 = vmatprep.subr.mxu0 0.0
  %402 = vmatpush1.msra.mxu0 0.0
  %403 = vmatprep.subr.mxu0 0.0
  %404 = vmatpush1.msra.mxu0 0.0
  %405 = vmatprep.mubr.f32.mxu0 0.0
  %406 = vmatmul.mubr.f32.gmra.mrb[0].mxu0 %v339
  %v407 = vpop.f32.mrb[0].mxu0
  %v408 = vadd.f32 %v337, %v407
  %v409 = vpop.f32.mrb[0].mxu0
  %410 = vdwg.mxu0
  %v411 = vand.u32 2147483647, %v408
  %v412 = vsub.f32 0.0, %v411
  %v413 = vmul.f32 %v412, 1.442695
  %v414 = vpow.pop %v413
  %v415 = vadd.f32 %v414, 1.0
  %v416 = vrcp.pop %v415
  %vm417 = vcmp.ge.f32.partialorder %v408, 0.0
  %v418 = vmul.f32 %v414, %v416
  %v419 = vsel %vm417, %v416, %v418
  %v420 = vmul.f32 %v408, %v419
  %vm421 = vcmp.gt.f32.partialorder %v408, 0.0
  %v422 = vsub.f32 %v414, 1.0
  %v423 = vsel %vm421, %v408, %v422
  %v424 = vsel %vm16, %v420, %v423
  %v425 = vld [vmem:[%s2 + $0xe0] sm:$0xff]
  %v426 = vld [vmem:[%s2 + $0xe8] sm:$0xff]
  %v427 = vld [vmem:[%s2 + $0xf0] sm:$0xff]
  %v428 = vld [vmem:[%s2 + $0xf8] sm:$0xff]
  %v429 = vld [vmem:[%s2 + $0x100] sm:$0xff]
  %v430 = vld [vmem:[%s2 + $0x108] sm:$0xff]
  %v431 = vld [vmem:[%s2 + $0x110] sm:$0xff]
  %v432 = vld [vmem:[%s2 + $0x118] sm:$0xff]
  %v433 = vld [vmem:[%s2 + $0x124] sm:$0x1]
  %v434 = vlaneseq
  %v435 = vshrl.u32 %v434, 7
  %v436 = vsub.s32 0, %v435
  %v437 = vrot.slane %v433, %v436
  %v439 = vsel %vm137, %v424, 0
  %441 = vmatprep.subr.mxu0 0.0
  %442 = vmatpush1.msra.mxu0 %v425
  %443 = vmatprep.subr.mxu0 0.0
  %444 = vmatpush1.msra.mxu0 %v426
  %445 = vmatprep.subr.mxu0 0.0
  %446 = vmatpush1.msra.mxu0 %v427
  %447 = vmatprep.subr.mxu0 0.0
  %448 = vmatpush1.msra.mxu0 %v428
  %449 = vmatprep.subr.mxu0 0.0
  %450 = vmatpush1.msra.mxu0 %v429
  %451 = vmatprep.subr.mxu0 0.0
  %452 = vmatpush1.msra.mxu0 %v430
  %453 = vmatprep.subr.mxu0 0.0
  %454 = vmatpush1.msra.mxu0 %v431
  %455 = vmatprep.subr.mxu0 0.0
  %456 = vmatpush1.msra.mxu0 %v432
  %457 = vmatprep.subr.mxu0 0.0
  %458 = vmatpush1.msra.mxu0 0.0
  %459 = vmatprep.subr.mxu0 0.0
  %460 = vmatpush1.msra.mxu0 0.0
  %461 = vmatprep.subr.mxu0 0.0
  %462 = vmatpush1.msra.mxu0 0.0
  %463 = vmatprep.subr.mxu0 0.0
  %464 = vmatpush1.msra.mxu0 0.0
  %465 = vmatprep.subr.mxu0 0.0
  %466 = vmatpush1.msra.mxu0 0.0
  %467 = vmatprep.subr.mxu0 0.0
  %468 = vmatpush1.msra.mxu0 0.0
  %469 = vmatprep.subr.mxu0 0.0
  %470 = vmatpush1.msra.mxu0 0.0
  %471 = vmatprep.subr.mxu0 0.0
  %472 = vmatpush1.msra.mxu0 0.0
  %473 = vmatprep.subr.mxu0 0.0
  %474 = vmatpush1.msra.mxu0 0.0
  %475 = vmatprep.subr.mxu0 0.0
  %476 = vmatpush1.msra.mxu0 0.0
  %477 = vmatprep.subr.mxu0 0.0
  %478 = vmatpush1.msra.mxu0 0.0
  %479 = vmatprep.subr.mxu0 0.0
  %480 = vmatpush1.msra.mxu0 0.0
  %481 = vmatprep.subr.mxu0 0.0
  %482 = vmatpush1.msra.mxu0 0.0
  %483 = vmatprep.subr.mxu0 0.0
  %484 = vmatpush1.msra.mxu0 0.0
  %485 = vmatprep.subr.mxu0 0.0
  %486 = vmatpush1.msra.mxu0 0.0
  %487 = vmatprep.subr.mxu0 0.0
  %488 = vmatpush1.msra.mxu0 0.0
  %489 = vmatprep.subr.mxu0 0.0
  %490 = vmatpush1.msra.mxu0 0.0
  %491 = vmatprep.subr.mxu0 0.0
  %492 = vmatpush1.msra.mxu0 0.0
  %493 = vmatprep.subr.mxu0 0.0
  %494 = vmatpush1.msra.mxu0 0.0
  %495 = vmatprep.subr.mxu0 0.0
  %496 = vmatpush1.msra.mxu0 0.0
  %497 = vmatprep.subr.mxu0 0.0
  %498 = vmatpush1.msra.mxu0 0.0
  %499 = vmatprep.subr.mxu0 0.0
  %500 = vmatpush1.msra.mxu0 0.0
  %501 = vmatprep.subr.mxu0 0.0
  %502 = vmatpush1.msra.mxu0 0.0
  %503 = vmatprep.subr.mxu0 0.0
  %504 = vmatpush1.msra.mxu0 0.0
  %505 = vmatprep.mubr.f32.mxu0 0.0
  %506 = vmatmul.mubr.f32.gmra.mrb[0].mxu0 %v439
  %v507 = vpop.f32.mrb[0].mxu0
  %v508 = vadd.f32 %v437, %v507
  %v509 = vpop.f32.mrb[0].mxu0
  %510 = vdwg.mxu0
  %v511 = vand.u32 2147483647, %v508
  %v512 = vsub.f32 0.0, %v511
  %v513 = vmul.f32 %v512, 1.442695
  %v514 = vpow.pop %v513
  %v515 = vadd.f32 %v514, 1.0
  %v516 = vrcp.pop %v515
  %vm517 = vcmp.ge.f32.partialorder %v508, 0.0
  %v518 = vmul.f32 %v514, %v516
  %v519 = vsel %vm517, %v516, %v518
  %vm520 = vcmp.eq.s32.totalorder %v15, 0
  %v521 = vsel %vm520, %v508, %v519
  %vm522 = vcmask 15360
  %523 = vst.msk [vmem:[%s3] sm:$0xff] %vm522, %v521
  // Predicated region
  $region14: #{net_forward.1} parent=0 // pred_check
    _
  $region15: #{net_forward.1} parent=0 // pred_check_branch
    %525 = sbr.rel (0) target = $region17
  $region16: #{net_forward.1} parent=0 // pred_region
    _
  $region17: #{net_forward.1} parent=0 // pred_fallthru
    _
  // Predicated region
  $region18: #{net_forward.1} parent=0 // pred_check
    _
  $region19: #{net_forward.1} parent=0 // pred_check_branch
    %527 = sbr.rel (0) target = $region21
  $region20: #{net_forward.1} parent=0 // pred_region
    _
  $region21: #{net_forward.1} parent=0 // pred_fallthru
    _

</llo_original>
